<compile_context>
chip_gen: v5e
topology: v5e:2x2
jax: 0.10.0
libtpu: 0.0.40
codegen_flags: <defaults>
</compile_context>

<pallas_src>
import jax
import jax.numpy as jnp
from jax import lax
from jax.experimental import pallas as pl
from jax.experimental.pallas import tpu as pltpu

EPS = 1e-5


def conv_bn_relu_kernel(wt_ref, pt_ref, g_ref, beta_ref, o_ref):
    # wt_ref   : (Cout, K)  conv weights, transposed   (Cout on sublanes)
    # pt_ref   : (K, M)     im2col patches, transposed (M = N*H*W on lanes)
    # g_ref    : (Cout, 1)  batchnorm gamma
    # beta_ref : (Cout, 1)  batchnorm beta
    # o_ref    : (Cout, M)  lane-dense output, no channel/K padding anywhere
    #
    # Single MXU contraction; acc is only (Cout, M) f32 = 4 vregs.
    acc = jnp.dot(wt_ref[...], pt_ref[...],
                  preferred_element_type=jnp.float32)            # (Cout, M)

    # BatchNorm2d (training mode): per-channel stats over rows == (N,H,W).
    # Centered (two-pass) variance: numerically safe, costs one extra pass
    # over a 4-vreg value.
    inv_m = 1.0 / acc.shape[1]
    mean = jnp.sum(acc, axis=1, keepdims=True) * inv_m           # (Cout, 1)
    centered = acc - mean
    var = jnp.sum(centered * centered, axis=1, keepdims=True) * inv_m

    # Fold BN affine into one per-channel scale; rsqrt goes to the EUP slot.
    scale = g_ref[...] * lax.rsqrt(var + EPS)

    # Fused scale + shift + ReLU, unmasked lane-dense store.
    o_ref[...] = jnp.maximum(centered * scale + beta_ref[...], 0.0
                             ).astype(o_ref.dtype)


def net_forward(x_nchw, w_oihw, bias, gamma, beta):
    """x_nchw: (N, Cin, H, W); returns (N, Cout, H, W) — PyTorch-compatible."""
    N, Cin, H, W = x_nchw.shape
    Cout = w_oihw.shape[0]
    K = 9 * Cin
    M = N * H * W

    # Training-mode BN subtracts the batch mean, which cancels the conv bias
    # exactly — dropping it is an optimization, not a behavior change.
    del bias

    # --- wrapper-side im2col, built directly in the transposed (K, M) layout
    #     (K index = tap*Cin + c, matching the weight reshape below). -------
    x_nhwc = jnp.transpose(x_nchw, (0, 2, 3, 1))
    x_pad = jnp.pad(x_nhwc, ((0, 0), (1, 1), (1, 1), (0, 0)))
    taps = [x_pad[:, dy:dy + H, dx:dx + W, :]
            for dy in range(3) for dx in range(3)]          # 9 x (N,H,W,Cin)
    patches_t = jnp.moveaxis(jnp.stack(taps, axis=0), -1, 1).reshape(K, M)

    # (Cout, Cin, 3, 3) -> (Cout, 3, 3, Cin) -> (Cout, 9*Cin): same K ordering.
    w_t = jnp.transpose(w_oihw, (0, 2, 3, 1)).reshape(Cout, K)
    g2 = gamma.reshape(Cout, 1)
    b2 = beta.reshape(Cout, 1)

    out_cm = pl.pallas_call(
        conv_bn_relu_kernel,
        out_shape=jax.ShapeDtypeStruct((Cout, M), x_nchw.dtype),
        grid=(1,),
        in_specs=[
            pl.BlockSpec((Cout, K), lambda i: (0, 0)),
            pl.BlockSpec((K, M), lambda i: (0, 0)),
            pl.BlockSpec((Cout, 1), lambda i: (0, 0)),
            pl.BlockSpec((Cout, 1), lambda i: (0, 0)),
        ],
        out_specs=pl.BlockSpec((Cout, M), lambda i: (0, 0)),
        compiler_params=pltpu.CompilerParams(
            dimension_semantics=("arbitrary",)),
    )(w_t, patches_t, g2, b2)

    # (Cout, M) -> (Cout, N, H, W) -> (N, Cout, H, W): one reshape + one
    # transpose; the channel-slice from the old lane-padded layout is gone.
    return jnp.transpose(out_cm.reshape(Cout, N, H, W), (1, 0, 2, 3))


if __name__ == "__main__":
    N, Cin, Cout, H, W = 2, 4, 8, 16, 16

    key = jax.random.PRNGKey(0)
    k_x, k_w, k_b, k_g, k_be = jax.random.split(key, 5)
    x = jax.random.normal(k_x, (N, Cin, H, W), jnp.float32)
    w = jax.random.normal(k_w, (Cout, Cin, 3, 3), jnp.float32) * 0.1
    bias = jax.random.normal(k_b, (Cout,), jnp.float32) * 0.1
    gamma = 1.0 + 0.1 * jax.random.normal(k_g, (Cout,), jnp.float32)
    beta = 0.1 * jax.random.normal(k_be, (Cout,), jnp.float32)

    fwd = jax.jit(net_forward)
    out = fwd(x, w, bias, gamma, beta)
    jax.block_until_ready(out)

    # Pure-JAX reference (same semantics as the PyTorch module, incl. bias).
    conv = lax.conv_general_dilated(
        x, w, window_strides=(1, 1), padding=((1, 1), (1, 1)),
        dimension_numbers=("NCHW", "OIHW", "NCHW"),
        precision=lax.Precision.HIGHEST) + bias[None, :, None, None]
    m = conv.mean(axis=(0, 2, 3), keepdims=True)
    v = ((conv - m) ** 2).mean(axis=(0, 2, 3), keepdims=True)
    ref = jnp.maximum(
        (conv - m) / jnp.sqrt(v + EPS) * gamma[None, :, None, None]
        + beta[None, :, None, None], 0.0)

    assert out.shape == (N, Cout, H, W)
    assert jnp.allclose(out, ref, atol=5e-4, rtol=5e-4), "mismatch vs reference"
    print("KERNEL_OK")
</pallas_src>

<mosaic_0001>
module attributes {stable_mosaic.version = 11 : i64} {
  func.func @conv_bn_relu_kernel(%arg0: i32, %arg1: memref<8x36xf32, #tpu.memory_space<vmem>>, %arg2: memref<36x512xf32, #tpu.memory_space<vmem>>, %arg3: memref<8x1xf32, #tpu.memory_space<vmem>>, %arg4: memref<8x1xf32, #tpu.memory_space<vmem>>, %arg5: memref<8x512xf32, #tpu.memory_space<vmem>>) attributes {dimension_semantics = [#tpu.dimension_semantics<arbitrary>], iteration_bounds = array<i64: 1>, scalar_prefetch = 0 : i64, scratch_operands = 0 : i64, tpu.core_type = #tpu.core_type<tc>, window_params = [{pipeline_mode = #tpu.pipeline_mode<synchronous>, transform_indices = @transform_0, window_bounds = array<i64: 8, 36>}, {pipeline_mode = #tpu.pipeline_mode<synchronous>, transform_indices = @transform_1, window_bounds = array<i64: 36, 512>}, {pipeline_mode = #tpu.pipeline_mode<synchronous>, transform_indices = @transform_2, window_bounds = array<i64: 8, 1>}, {pipeline_mode = #tpu.pipeline_mode<synchronous>, transform_indices = @transform_3, window_bounds = array<i64: 8, 1>}, {pipeline_mode = #tpu.pipeline_mode<synchronous>, transform_indices = @transform_4, window_bounds = array<i64: 8, 512>}]} {
    %c0 = arith.constant 0 : index
    %c0_0 = arith.constant 0 : index
    %0 = vector.load %arg1[%c0, %c0_0] : memref<8x36xf32, #tpu.memory_space<vmem>>, vector<8x36xf32>
    %c0_1 = arith.constant 0 : index
    %c0_2 = arith.constant 0 : index
    %1 = vector.load %arg2[%c0_1, %c0_2] : memref<36x512xf32, #tpu.memory_space<vmem>>, vector<36x512xf32>
    %cst = arith.constant dense<0.000000e+00> : vector<8x512xf32>
    %2 = tpu.matmul %0, %1, %cst {dimension_numbers = #tpu.dot_dimension_numbers<[1], [0], [0], [1], [0, 0, 1, 1], [], []>} : vector<8x36xf32>, vector<36x512xf32>, vector<8x512xf32> -> vector<8x512xf32>
    %cst_3 = arith.constant dense<0.000000e+00> : vector<8xf32>
    %3 = vector.multi_reduction <add>, %2, %cst_3 [1] : vector<8x512xf32> to vector<8xf32>
    %4 = vector.shape_cast %3 : vector<8xf32> to vector<8x1xf32>
    %cst_4 = arith.constant 0.001953125 : f32
    %5 = vector.broadcast %cst_4 : f32 to vector<8x1xf32>
    %6 = arith.mulf %4, %5 : vector<8x1xf32>
    %7 = vector.broadcast %6 : vector<8x1xf32> to vector<8x512xf32>
    %8 = arith.subf %2, %7 : vector<8x512xf32>
    %9 = arith.mulf %8, %8 : vector<8x512xf32>
    %cst_5 = arith.constant dense<0.000000e+00> : vector<8xf32>
    %10 = vector.multi_reduction <add>, %9, %cst_5 [1] : vector<8x512xf32> to vector<8xf32>
    %11 = vector.shape_cast %10 : vector<8xf32> to vector<8x1xf32>
    %cst_6 = arith.constant 0.001953125 : f32
    %12 = vector.broadcast %cst_6 : f32 to vector<8x1xf32>
    %13 = arith.mulf %11, %12 : vector<8x1xf32>
    %c0_7 = arith.constant 0 : index
    %c0_8 = arith.constant 0 : index
    %14 = vector.load %arg3[%c0_7, %c0_8] : memref<8x1xf32, #tpu.memory_space<vmem>>, vector<8x1xf32>
    %cst_9 = arith.constant 9.99999974E-6 : f32
    %15 = vector.broadcast %cst_9 : f32 to vector<8x1xf32>
    %16 = arith.addf %13, %15 : vector<8x1xf32>
    %17 = math.rsqrt %16 : vector<8x1xf32>
    %18 = arith.mulf %14, %17 : vector<8x1xf32>
    %19 = vector.broadcast %18 : vector<8x1xf32> to vector<8x512xf32>
    %20 = arith.mulf %8, %19 : vector<8x512xf32>
    %c0_10 = arith.constant 0 : index
    %c0_11 = arith.constant 0 : index
    %21 = vector.load %arg4[%c0_10, %c0_11] : memref<8x1xf32, #tpu.memory_space<vmem>>, vector<8x1xf32>
    %22 = vector.broadcast %21 : vector<8x1xf32> to vector<8x512xf32>
    %23 = arith.addf %20, %22 : vector<8x512xf32>
    %cst_12 = arith.constant 0.000000e+00 : f32
    %24 = vector.broadcast %cst_12 : f32 to vector<8x512xf32>
    %25 = arith.maximumf %23, %24 : vector<8x512xf32>
    %c0_13 = arith.constant 0 : index
    %c0_14 = arith.constant 0 : index
    %26 = vector.load %arg5[%c0_13, %c0_14] : memref<8x512xf32, #tpu.memory_space<vmem>>, vector<8x512xf32>
    tpu.vector_store %arg5[%c0_13, %c0_14], %25 {strides = array<i32>} : memref<8x512xf32, #tpu.memory_space<vmem>>, vector<8x512xf32>,
    return
  }
  func.func @transform_0(%arg0: i32) -> (i32, i32) {
    %c0_i32 = arith.constant 0 : i32
    %c0_i32_0 = arith.constant 0 : i32
    %c0_i32_1 = arith.constant 0 : i32
    return %c0_i32, %c0_i32_0 : i32, i32
  }
  func.func @transform_1(%arg0: i32) -> (i32, i32) {
    %c0_i32 = arith.constant 0 : i32
    %c0_i32_0 = arith.constant 0 : i32
    %c0_i32_1 = arith.constant 0 : i32
    return %c0_i32, %c0_i32_0 : i32, i32
  }
  func.func @transform_2(%arg0: i32) -> (i32, i32) {
    %c0_i32 = arith.constant 0 : i32
    %c0_i32_0 = arith.constant 0 : i32
    %c0_i32_1 = arith.constant 0 : i32
    return %c0_i32, %c0_i32_0 : i32, i32
  }
  func.func @transform_3(%arg0: i32) -> (i32, i32) {
    %c0_i32 = arith.constant 0 : i32
    %c0_i32_0 = arith.constant 0 : i32
    %c0_i32_1 = arith.constant 0 : i32
    return %c0_i32, %c0_i32_0 : i32, i32
  }
  func.func @transform_4(%arg0: i32) -> (i32, i32) {
    %c0_i32 = arith.constant 0 : i32
    %c0_i32_0 = arith.constant 0 : i32
    %c0_i32_1 = arith.constant 0 : i32
    return %c0_i32, %c0_i32_0 : i32, i32
  }
}

</mosaic_0001>

<llo_original>
// kernel: net_forward.1
$region0: #{net_forward.1}
  #allocation0 [shape = 'u32[]', space=smem, size = 0x4, offset = 0x4, fixed_abs, tag = 'smem constant byte address 0x4 - core index']
  #allocation1 [shape = 'u32[72,128]{1,0:T(1,128)}', space=vmem, size = 0x9000, scoped, tag = 'internal scratch']
  %s0 = inlined_call_operand.vmem [shape: f32[8,36], index: 0, kind: input, shape index: {}]
  %s1 = inlined_call_operand.vmem [shape: f32[36,512], index: 1, kind: input, shape index: {}]
  %s2 = inlined_call_operand.vmem [shape: f32[8,1], index: 2, kind: input, shape index: {}]
  %s3 = inlined_call_operand.vmem [shape: f32[8,1], index: 3, kind: input, shape index: {}]
  %s4 = inlined_call_operand.vmem [shape: f32[8,512], index: 4, kind: output, shape index: {}]
  %s5 = sld [smem:[#allocation0]]
  $region26: #{net_forward.1} parent=0
    _
  %s7 = ssub.s32 1, %s5
  %s8 = scalar_select 0, %s7, %s5
  // Predicated region
  $region2: #{net_forward.1} parent=0 // pred_check
    _
  $region3: #{net_forward.1} parent=0 // pred_check_branch
    %10 = sbr.rel (0) target = $region5
  $region4: #{net_forward.1} parent=0 // pred_region
    _
  $region5: #{net_forward.1} parent=0 // pred_fallthru
    _
  // Predicated region
  $region6: #{net_forward.1} parent=0 // pred_check
    _
  $region7: #{net_forward.1} parent=0 // pred_check_branch
    %12 = sbr.rel (0) target = $region9
  $region8: #{net_forward.1} parent=0 // pred_region
    _
  $region9: #{net_forward.1} parent=0 // pred_fallthru
    _
  // Predicated region
  $region10: #{net_forward.1} parent=0 // pred_check
    _
  $region11: #{net_forward.1} parent=0 // pred_check_branch
    %14 = sbr.rel (0) target = $region13
  $region12: #{net_forward.1} parent=0 // pred_region
    _
  $region13: #{net_forward.1} parent=0 // pred_fallthru
    _
  // Predicated region
  $region14: #{net_forward.1} parent=0 // pred_check
    _
  $region15: #{net_forward.1} parent=0 // pred_check_branch
    %16 = sbr.rel (0) target = $region17
  $region16: #{net_forward.1} parent=0 // pred_region
    _
  $region17: #{net_forward.1} parent=0 // pred_fallthru
    _
  %v17 = vld [vmem:[%s0] sm:$0xff]
  %v18 = vld [vmem:[%s1] sm:$0xff]
  %v19 = vld [vmem:[%s1 + $0x8] sm:$0xff]
  %v20 = vld [vmem:[%s1 + $0x10] sm:$0xff]
  %v21 = vld [vmem:[%s1 + $0x18] sm:$0xff]
  %v22 = vld [vmem:[%s1 + $0x20] sm:$0xff]
  %v23 = vld [vmem:[%s1 + $0x28] sm:$0xff]
  %v24 = vld [vmem:[%s1 + $0x30] sm:$0xff]
  %v25 = vld [vmem:[%s1 + $0x38] sm:$0xff]
  %v26 = vld [vmem:[%s1 + $0x40] sm:$0xff]
  %v27 = vld [vmem:[%s1 + $0x48] sm:$0xff]
  %v28 = vld [vmem:[%s1 + $0x50] sm:$0xff]
  %v29 = vld [vmem:[%s1 + $0x58] sm:$0xff]
  %v30 = vld [vmem:[%s1 + $0x60] sm:$0xff]
  %v31 = vld [vmem:[%s1 + $0x68] sm:$0xff]
  %v32 = vld [vmem:[%s1 + $0x70] sm:$0xff]
  %v33 = vld [vmem:[%s1 + $0x78] sm:$0xff]
  %v34 = vld [vmem:[%s1 + $0x80] sm:$0xf]
  %v35 = vld [vmem:[%s1 + $0x88] sm:$0xf]
  %v36 = vld [vmem:[%s1 + $0x90] sm:$0xf]
  %v37 = vld [vmem:[%s1 + $0x98] sm:$0xf]
  %vm38 = vcmask 293888
  %v40 = vsel %vm38, %v17, 0
  %vm42 = vcmask 1043456
  %v44 = vsel %vm42, %v34, 0
  %v47 = vsel %vm42, %v35, 0
  %v50 = vsel %vm42, %v36, 0
  %v53 = vsel %vm42, %v37, 0
  %55 = vmatpush.msra.mxu0 0.0
  %56 = vmatpush.msra.mxu0 0.0
  %57 = vmatpush.msra.mxu0 0.0
  %58 = vmatpush.msra.mxu0 0.0
  %59 = vmatpush.msra.mxu0 0.0
  %60 = vmatpush.msra.mxu0 0.0
  %61 = vmatpush.msra.mxu0 0.0
  %62 = vmatpush.msra.mxu0 0.0
  %63 = vmatpush.msra.mxu0 0.0
  %64 = vmatpush.msra.mxu0 0.0
  %65 = vmatpush.msra.mxu0 0.0
  %66 = vmatpush.msra.mxu0 %v44
  %67 = vmatpush.msra.mxu0 %v30
  %68 = vmatpush.msra.mxu0 %v26
  %69 = vmatpush.msra.mxu0 %v22
  %70 = vmatpush.msra.mxu0 %v18
  %71 = vmatmul.f32.gmra.mxu0 %v40
  %v72 = vpop.f32.mrf.mxu0
  %v73 = vadd.f32 0.0, %v72
  %74 = vdwg.mxu0
  %75 = vmatpush.msra.mxu0 0.0
  %76 = vmatpush.msra.mxu0 0.0
  %77 = vmatpush.msra.mxu0 0.0
  %78 = vmatpush.msra.mxu0 0.0
  %79 = vmatpush.msra.mxu0 0.0
  %80 = vmatpush.msra.mxu0 0.0
  %81 = vmatpush.msra.mxu0 0.0
  %82 = vmatpush.msra.mxu0 0.0
  %83 = vmatpush.msra.mxu0 0.0
  %84 = vmatpush.msra.mxu0 0.0
  %85 = vmatpush.msra.mxu0 0.0
  %86 = vmatpush.msra.mxu0 %v47
  %87 = vmatpush.msra.mxu0 %v31
  %88 = vmatpush.msra.mxu0 %v27
  %89 = vmatpush.msra.mxu0 %v23
  %90 = vmatpush.msra.mxu0 %v19
  %91 = vmatmul.f32.gmra.mxu0 %v40
  %v92 = vpop.f32.mrf.mxu0
  %v93 = vadd.f32 0.0, %v92
  %94 = vdwg.mxu0
  %95 = vmatpush.msra.mxu0 0.0
  %96 = vmatpush.msra.mxu0 0.0
  %97 = vmatpush.msra.mxu0 0.0
  %98 = vmatpush.msra.mxu0 0.0
  %99 = vmatpush.msra.mxu0 0.0
  %100 = vmatpush.msra.mxu0 0.0
  %101 = vmatpush.msra.mxu0 0.0
  %102 = vmatpush.msra.mxu0 0.0
  %103 = vmatpush.msra.mxu0 0.0
  %104 = vmatpush.msra.mxu0 0.0
  %105 = vmatpush.msra.mxu0 0.0
  %106 = vmatpush.msra.mxu0 %v50
  %107 = vmatpush.msra.mxu0 %v32
  %108 = vmatpush.msra.mxu0 %v28
  %109 = vmatpush.msra.mxu0 %v24
  %110 = vmatpush.msra.mxu0 %v20
  %111 = vmatmul.f32.gmra.mxu0 %v40
  %v112 = vpop.f32.mrf.mxu0
  %v113 = vadd.f32 0.0, %v112
  %114 = vdwg.mxu0
  %115 = vmatpush.msra.mxu0 0.0
  %116 = vmatpush.msra.mxu0 0.0
  %117 = vmatpush.msra.mxu0 0.0
  %118 = vmatpush.msra.mxu0 0.0
  %119 = vmatpush.msra.mxu0 0.0
  %120 = vmatpush.msra.mxu0 0.0
  %121 = vmatpush.msra.mxu0 0.0
  %122 = vmatpush.msra.mxu0 0.0
  %123 = vmatpush.msra.mxu0 0.0
  %124 = vmatpush.msra.mxu0 0.0
  %125 = vmatpush.msra.mxu0 0.0
  %126 = vmatpush.msra.mxu0 %v53
  %127 = vmatpush.msra.mxu0 %v33
  %128 = vmatpush.msra.mxu0 %v29
  %129 = vmatpush.msra.mxu0 %v25
  %130 = vmatpush.msra.mxu0 %v21
  %131 = vmatmul.f32.gmra.mxu0 %v40
  %v132 = vpop.f32.mrf.mxu0
  %v133 = vadd.f32 0.0, %v132
  %134 = vdwg.mxu0
  %v135 = vadd.f32 %v73, %v93
  %v136 = vadd.f32 %v135, %v113
  %v137 = vadd.f32 %v136, %v133
  %138 = vadd.xlane.f32.xlu0 %v137
  %v139 = vpop.xlane.xlu0 %138
  %v140 = vmul.f32 %v139, 0.001953125
  %v141 = vsub.f32 %v73, %v140
  %v142 = vsub.f32 %v93, %v140
  %v143 = vsub.f32 %v113, %v140
  %v144 = vsub.f32 %v133, %v140
  %v145 = vmul.f32 %v141, %v141
  %v146 = vmul.f32 %v142, %v142
  %v147 = vmul.f32 %v143, %v143
  %v148 = vmul.f32 %v144, %v144
  %v149 = vadd.f32 %v145, %v146
  %v150 = vadd.f32 %v149, %v147
  %v151 = vadd.f32 %v150, %v148
  %152 = vadd.xlane.f32.xlu0 %v151
  %v153 = vpop.xlane.xlu0 %152
  %v154 = vmul.f32 %v153, 0.001953125
  %v155 = vld [vmem:[%s2] sm:$0xff]
  %v156 = vadd.f32 %v154, 1e-05
  %v157 = vrsqrt.pop %v156
  %v158 = vmul.f32 %v157, %v156
  %v159 = vmul.f32 %v158, %v157
  %v160 = vmul.f32 0.5, %v159
  %v161 = vsub.f32 1.5, %v160
  %v162 = vmul.f32 %v157, %v161
  %vm163 = vweird.f32 %v156
  %vm164 = vweird.f32 %v157
  %vm165 = vmor %vm163, %vm164
  %v166 = vsel %vm165, %v157, %v162
  %v167 = vmul.f32 %v155, %v166
  %169 = vset.pattern.permute.xlu0 0
  %170 = vperm.xlu0 %169, %v167
  %v171 = vpop.permute.xlu0 %170
  %v173 = vmul.f32 %v141, %v171
  %v174 = vmul.f32 %v142, %v171
  %v175 = vmul.f32 %v143, %v171
  %v176 = vmul.f32 %v144, %v171
  %v177 = vld [vmem:[%s3] sm:$0xff]
  %179 = vset.pattern.permute.xlu0 0
  %180 = vperm.xlu0 %179, %v177
  %v181 = vpop.permute.xlu0 %180
  %v183 = vadd.f32 %v173, %v181
  %v184 = vadd.f32 %v174, %v181
  %v185 = vadd.f32 %v175, %v181
  %v186 = vadd.f32 %v176, %v181
  %v187 = vmax.f32 %v183, 0.0
  %v188 = vmax.f32 %v184, 0.0
  %v189 = vmax.f32 %v185, 0.0
  %v190 = vmax.f32 %v186, 0.0
  %191 = vst [vmem:[%s4] sm:$0xff] %v187
  %192 = vst [vmem:[%s4 + $0x8] sm:$0xff] %v188
  %193 = vst [vmem:[%s4 + $0x10] sm:$0xff] %v189
  %194 = vst [vmem:[%s4 + $0x18] sm:$0xff] %v190
  // Predicated region
  $region18: #{net_forward.1} parent=0 // pred_check
    _
  $region19: #{net_forward.1} parent=0 // pred_check_branch
    %196 = sbr.rel (0) target = $region21
  $region20: #{net_forward.1} parent=0 // pred_region
    _
  $region21: #{net_forward.1} parent=0 // pred_fallthru
    _
  // Predicated region
  $region22: #{net_forward.1} parent=0 // pred_check
    _
  $region23: #{net_forward.1} parent=0 // pred_check_branch
    %198 = sbr.rel (0) target = $region25
  $region24: #{net_forward.1} parent=0 // pred_region
    _
  $region25: #{net_forward.1} parent=0 // pred_fallthru
    _

</llo_original>
